<compile_context>
chip_gen: v7x
topology: tpu7x:2x2x1
jax: 0.10.0
libtpu: 0.0.40
codegen_flags: <defaults>
</compile_context>

<pallas_src>
import functools

import jax
import jax.numpy as jnp
from jax.experimental import pallas as pl
from jax.experimental.pallas import tpu as pltpu

_LANES = 128


# ----------------------------------------------------------------------------
# Kernel body
# ----------------------------------------------------------------------------
def _biexp_kernel(x_ref, o_ref, *, max_light):
    x = x_ref[...]
    # All ops stay in the input dtype (no implicit f32 promotion; keeps the
    # VALU slot off the critical path for bf16 on v7x). exp lowers to the EUP.
    clamped = jnp.minimum(jnp.abs(x), jnp.asarray(max_light, dtype=x.dtype))
    # NOTE: literal exp()-1 to match the PyTorch module (not expm1).
    e = jnp.exp(clamped) - jnp.asarray(1.0, dtype=x.dtype)
    o_ref[...] = jnp.where(x > 0, e, -e)


# ----------------------------------------------------------------------------
# Helpers
# ----------------------------------------------------------------------------
def _sublane_multiple(dtype) -> int:
    # Sub-32-bit dtypes pack along sublanes: f32 -> 8, bf16 -> 16, int8 -> 32.
    itemsize = jnp.dtype(dtype).itemsize
    return 8 * max(1, 4 // max(1, itemsize))


def _round_up(v, m):
    return ((v + m - 1) // m) * m


@functools.lru_cache(maxsize=1)
def _chip_params():
    """Generation-aware block-size / VMEM-limit constants."""
    try:
        kind = jax.devices()[0].device_kind.lower()
    except Exception:  # pragma: no cover - defensive
        kind = ""
    if "v7" in kind:
        # v7x: 2 TensorCores/chip, ~3.2 TB/s HBM, 64 MiB VMEM per TC (default
        # scoped limit only 32 MiB -> must be raised for 6 MiB double-buffered
        # in+out blocks).
        return {"block_bytes": 6 << 20, "vmem_limit": 48 << 20, "tensorcores": 2}
    # v5e / v6e: single TensorCore (grid is a serial loop), 128 MiB physical
    # VMEM. 4 MiB blocks keep the ~0.35 us/step overhead around ~5%; raise the
    # scoped limit (default 16/32 MiB) so 2x(in+out) fits comfortably.
    return {"block_bytes": 4 << 20, "vmem_limit": 64 << 20, "tensorcores": 1}


def _biexp_jnp(x, max_light):
    """Fused-XLA fallback for tiny / ragged inputs (already at the roofline)."""
    clamped = jnp.minimum(jnp.abs(x), jnp.asarray(max_light, dtype=x.dtype))
    e = jnp.exp(clamped) - jnp.asarray(1.0, dtype=x.dtype)
    return jnp.where(x > 0, e, -e)


# ----------------------------------------------------------------------------
# Public wrapper
# ----------------------------------------------------------------------------
def biexp_activation(x, max_light=5.0, *, block_bytes=None,
                     min_pallas_bytes=512 * 1024):
    """Elementwise BiExp activation; accepts any shape / float dtype."""
    orig_shape = x.shape
    dtype = x.dtype
    total = x.size
    if total == 0:
        return x

    itemsize = jnp.dtype(dtype).itemsize
    params = _chip_params()
    if block_bytes is None:
        block_bytes = params["block_bytes"]

    # Fallbacks: tiny inputs (fixed pallas_call cost dominates) and ragged
    # tails (pad + slice would add an extra full HBM read+write each way).
    if total * itemsize < min_pallas_bytes or total % _LANES != 0:
        return _biexp_jnp(x, max_light)

    rows = total // _LANES
    sub = _sublane_multiple(dtype)
    x2d = x.reshape(rows, _LANES)  # lane-dense slab; reshape of contiguous data

    # ---- row-tile selection --------------------------------------------------
    block_rows = max(sub, (block_bytes // (_LANES * itemsize)) // sub * sub)
    if rows <= block_rows:
        tr = rows          # full-extent block: always a legal block shape
    else:
        tr = block_rows    # sublane-aligned ~block_bytes tile

    steps = pl.cdiv(rows, tr)

    # v7x only: make the "parallel" grid shard evenly across the 2 TensorCores.
    # Require >= 2 steps when each half still exceeds ~2 MiB, and an even step
    # count so a partial tail doesn't idle one core.
    if params["tensorcores"] == 2:
        min_rows = max(sub, ((2 << 20) // (_LANES * itemsize)) // sub * sub)
        if steps == 1 and rows >= 2 * min_rows:
            steps = 2
        if steps > 1 and steps % 2 == 1:
            steps += 1
        if steps > 1:
            tr = max(sub, _round_up(pl.cdiv(rows, steps), sub))
            steps = pl.cdiv(rows, tr)

    grid = (steps,)  # partial last block is masked by Pallas

    kernel = functools.partial(_biexp_kernel, max_light=max_light)

    out2d = pl.pallas_call(
        kernel,
        out_shape=jax.ShapeDtypeStruct((rows, _LANES), dtype),
        grid_spec=pltpu.PrefetchScalarGridSpec(
            num_scalar_prefetch=0,
            grid=grid,
            in_specs=[pl.BlockSpec((tr, _LANES), lambda i: (i, 0))],
            out_specs=pl.BlockSpec((tr, _LANES), lambda i: (i, 0)),
        ),
        compiler_params=pltpu.CompilerParams(
            dimension_semantics=("parallel",),
            vmem_limit_bytes=params["vmem_limit"],
        ),
        cost_estimate=pl.CostEstimate(
            flops=5 * total,
            transcendentals=total,
            bytes_accessed=2 * total * itemsize,
        ),
    )(x2d)

    return out2d.reshape(orig_shape)


def biexp_reference(x, max_light=5.0):
    clamped = jnp.minimum(jnp.abs(x), jnp.asarray(max_light, dtype=x.dtype))
    e = jnp.exp(clamped) - jnp.asarray(1.0, dtype=x.dtype)
    return jnp.where(x > 0, e, -e)


if __name__ == "__main__":
    key = jax.random.PRNGKey(0)

    # 1) Canonical module-sized input (NCHW), forced through the Pallas path so
    #    the kernel itself is exercised even though it's below the small-input
    #    fallback threshold.
    x1 = jax.random.normal(key, (2, 4, 16, 16), dtype=jnp.float32) * 4.0
    out1 = jax.block_until_ready(biexp_activation(x1, max_light=5.0,
                                                  min_pallas_bytes=0))
    assert out1.shape == x1.shape and out1.dtype == x1.dtype
    assert jnp.allclose(out1, biexp_reference(x1, 5.0), rtol=1e-5, atol=1e-5), \
        "mismatch (main NCHW)"

    # 2) Streaming-sized input through the default (large-block) config.
    x2 = jax.random.normal(jax.random.PRNGKey(1), (1024, 640),
                           dtype=jnp.float32) * 4.0
    out2 = jax.block_until_ready(biexp_activation(x2, max_light=5.0))
    assert jnp.allclose(out2, biexp_reference(x2, 5.0), rtol=1e-5, atol=1e-5), \
        "mismatch (streaming)"

    # 3) Multi-step grid with a partial last block (small block_bytes override).
    x3 = jax.random.normal(jax.random.PRNGKey(2), (100, 128),
                           dtype=jnp.float32) * 4.0
    out3 = jax.block_until_ready(
        biexp_activation(x3, max_light=5.0, block_bytes=16 * 1024,
                         min_pallas_bytes=0))
    assert jnp.allclose(out3, biexp_reference(x3, 5.0), rtol=1e-5, atol=1e-5), \
        "mismatch (partial block)"

    # 4) Ragged tail (total % 128 != 0) -> fused-XLA fallback, no pad/slice.
    x4 = jax.random.normal(jax.random.PRNGKey(3), (3, 5, 7, 11),
                           dtype=jnp.float32) * 4.0
    out4 = jax.block_until_ready(biexp_activation(x4, max_light=5.0))
    assert jnp.allclose(out4, biexp_reference(x4, 5.0), rtol=1e-5, atol=1e-5), \
        "mismatch (ragged tail)"

    # 5) bf16 path (sublane multiple 16, native-dtype compute in the kernel).
    x5 = (jax.random.normal(jax.random.PRNGKey(4), (64, 256),
                            dtype=jnp.float32) * 4.0).astype(jnp.bfloat16)
    out5 = jax.block_until_ready(biexp_activation(x5, max_light=5.0,
                                                  min_pallas_bytes=0))
    assert out5.dtype == jnp.bfloat16
    assert jnp.allclose(out5.astype(jnp.float32),
                        biexp_reference(x5, 5.0).astype(jnp.float32),
                        rtol=2e-2, atol=2e-2), "mismatch (bf16)"

    print("KERNEL_OK")
</pallas_src>

<mosaic_0001>
module attributes {stable_mosaic.version = 11 : i64} {
  func.func @_biexp_kernel(%arg0: i32, %arg1: memref<16x128xf32, #tpu.memory_space<vmem>>, %arg2: memref<16x128xf32, #tpu.memory_space<vmem>>) attributes {dimension_semantics = [#tpu.dimension_semantics<parallel>], iteration_bounds = array<i64: 1>, scalar_prefetch = 0 : i64, scratch_operands = 0 : i64, tpu.core_type = #tpu.core_type<tc>, window_params = [{transform_indices = @transform_0, window_bounds = array<i64: 16, 128>}, {transform_indices = @transform_1, window_bounds = array<i64: 16, 128>}]} {
    %c0 = arith.constant 0 : index
    %c0_0 = arith.constant 0 : index
    %0 = vector.load %arg1[%c0, %c0_0] : memref<16x128xf32, #tpu.memory_space<vmem>>, vector<16x128xf32>
    %1 = math.absf %0 : vector<16x128xf32>
    %cst = arith.constant 5.000000e+00 : f32
    %2 = vector.broadcast %cst : f32 to vector<16x128xf32>
    %3 = arith.minimumf %1, %2 : vector<16x128xf32>
    %4 = math.exp %3 : vector<16x128xf32>
    %cst_1 = arith.constant 1.000000e+00 : f32
    %5 = vector.broadcast %cst_1 : f32 to vector<16x128xf32>
    %6 = arith.subf %4, %5 : vector<16x128xf32>
    %cst_2 = arith.constant 0.000000e+00 : f32
    %7 = vector.broadcast %cst_2 : f32 to vector<16x128xf32>
    %8 = arith.cmpf ogt, %0, %7 : vector<16x128xf32>
    %cst_3 = arith.constant 0.000000e+00 : f32
    %9 = vector.broadcast %cst_3 : f32 to vector<16x128xf32>
    %10 = arith.subf %9, %6 : vector<16x128xf32>
    %11 = arith.select %8, %6, %10 : vector<16x128xi1>, vector<16x128xf32>
    %c0_4 = arith.constant 0 : index
    %c0_5 = arith.constant 0 : index
    %12 = vector.load %arg2[%c0_4, %c0_5] : memref<16x128xf32, #tpu.memory_space<vmem>>, vector<16x128xf32>
    tpu.vector_store %arg2[%c0_4, %c0_5], %11 {strides = array<i32>} : memref<16x128xf32, #tpu.memory_space<vmem>>, vector<16x128xf32>,
    return
  }
  func.func @transform_0(%arg0: i32) -> (i32, i32) {
    %c0_i32 = arith.constant 0 : i32
    %c0_i32_0 = arith.constant 0 : i32
    return %arg0, %c0_i32 : i32, i32
  }
  func.func @transform_1(%arg0: i32) -> (i32, i32) {
    %c0_i32 = arith.constant 0 : i32
    %c0_i32_0 = arith.constant 0 : i32
    return %arg0, %c0_i32 : i32, i32
  }
}

</mosaic_0001>

<llo_original>
// kernel: tpu_custom_call.1
$region0: #{tpu_custom_call.1}
  #allocation0 [shape = 'u32[]', space=smem, size = 0x4, offset = 0x4, fixed_abs, tag = 'smem constant byte address 0x4 - core index']
  #allocation1 [shape = 'u32[144,128]{1,0:T(1,128)}', space=vmem, size = 0x12000, scoped, tag = 'internal scratch']
  %s0 = inlined_call_operand.hbm [shape: f32[16,128], index: 0, kind: input, shape index: {}]
  %s1 = inlined_call_operand.hbm [shape: f32[16,128], index: 1, kind: output, shape index: {}]
  %s2 = sld [smem:[#allocation0]]
  $region18: #{tpu_custom_call.1} parent=0
    _
  %s4 = ssub.s32 1, %s2
  %s5 = scalar_select 0, %s4, %s2
  $region1: #{tpu_custom_call.1} parent=0
    #allocation2 [shape = 'u8[8192]{0}', space=vmem, size = 0x2000, scoped, tag = 'input window, operand 0, single buffered']
    #allocation3 [shape = 's32[1]{0}', space=sflag, size = 0x4, scoped, tag = 'scoped memory for tpu_custom_call.1']
    #allocation4 [shape = 's32[1]{0}', space=sflag, size = 0x4, scoped, tag = 'scoped memory for tpu_custom_call.1']
    #allocation5 [shape = 'u8[8192]{0}', space=vmem, size = 0x2000, scoped, tag = 'output window, operand 0, single buffered']
    %6 = vsyncpa [#allocation3], 0
    %7 = vsyncpa [#allocation4], 0
    // Predicated region
    $region2: #{tpu_custom_call.1} parent=1 // pred_check
      _
    $region3: #{tpu_custom_call.1} parent=1 // pred_check_branch
      %9 = sbr.rel (0) target = $region5
    $region4: #{tpu_custom_call.1} parent=1 // pred_region
      %s11 = ssub.s32 256, 256
      %12 = vsyncadd [#allocation3], %s11
      %s13 = sshll.u32 [#allocation2], 4
      %s14 = int_to_ptr.vmem [resolvable:$true] %s13
      %19 = dma.hbm_to_vmem [thread:$0]  %s0, 256, %s14, [#allocation3], 128, 128, 8
    $region5: #{tpu_custom_call.1} parent=1 // pred_fallthru
      _
    // Predicated region
    $region6: #{tpu_custom_call.1} parent=1 // pred_check
      _
    $region7: #{tpu_custom_call.1} parent=1 // pred_check_branch
      %21 = sbr.rel (0) target = $region9
    $region8: #{tpu_custom_call.1} parent=1 // pred_region
      %22 = dma.done [#allocation3], 256
    $region9: #{tpu_custom_call.1} parent=1 // pred_fallthru
      _
    %v23 = vld [vmem:[#allocation2] sm:$0xff]
    %v24 = vld [vmem:[#allocation2 + $0x8] sm:$0xff]
    %v25 = vand.u32 2147483647, %v23
    %v26 = vand.u32 2147483647, %v24
    %v27 = vmin.f32 %v25, 5.0
    %v28 = vmin.f32 %v26, 5.0
    %v29 = vmul.f32 %v27, 1.442695
    %v30 = vpow.pop %v29
    %v31 = vmul.f32 %v28, 1.442695
    %v32 = vpow.pop %v31
    %v33 = vsub.f32 %v30, 1.0
    %v34 = vsub.f32 %v32, 1.0
    %vm35 = vcmp.gt.f32.partialorder %v23, 0.0
    %vm36 = vcmp.gt.f32.partialorder %v24, 0.0
    %v37 = vsub.f32 0.0, %v33
    %v38 = vsub.f32 0.0, %v34
    %v39 = vsel %vm35, %v33, %v37
    %v40 = vsel %vm36, %v34, %v38
    %41 = vst [vmem:[#allocation5] sm:$0xff] %v39
    %42 = vst [vmem:[#allocation5 + $0x8] sm:$0xff] %v40
    // Predicated region
    $region10: #{tpu_custom_call.1} parent=1 // pred_check
      _
    $region11: #{tpu_custom_call.1} parent=1 // pred_check_branch
      %44 = sbr.rel (0) target = $region13
    $region12: #{tpu_custom_call.1} parent=1 // pred_region
      %s46 = ssub.s32 256, 256
      %47 = vsyncadd [#allocation4], %s46
      %s48 = sshll.u32 [#allocation5], 4
      %s49 = int_to_ptr.vmem [resolvable:$true] %s48
      %54 = dma.vmem_to_hbm [thread:$0]  %s49, 256, %s1, [#allocation4], 128, 128, 8
    $region13: #{tpu_custom_call.1} parent=1 // pred_fallthru
      _
    // Predicated region
    $region14: #{tpu_custom_call.1} parent=1 // pred_check
      _
    $region15: #{tpu_custom_call.1} parent=1 // pred_check_branch
      %56 = sbr.rel (0) target = $region17
    $region16: #{tpu_custom_call.1} parent=1 // pred_region
      %57 = dma.done [#allocation4], 256
    $region17: #{tpu_custom_call.1} parent=1 // pred_fallthru
      _
    %58 = vsyncpa [#allocation3], 1
    %59 = vsyncpa [#allocation4], 1

</llo_original>
